<compile_context>
chip_gen: v7x
topology: tpu7x:2x2x1
jax: 0.10.0
libtpu: 0.0.40
codegen_flags: <defaults>
</compile_context>

<pallas_src>
import jax
import jax.numpy as jnp
from jax.experimental import pallas as pl
from jax.experimental.pallas import tpu as pltpu


def _round_up(x, m):
    return (x + m - 1) // m * m


def _largest_aligned_divisor(total, align, cap):
    """Largest d <= cap with d % align == 0 and total % d == 0 (total % align == 0)."""
    best = align
    d = align
    limit = min(total, cap)
    while d <= limit:
        if total % d == 0:
            best = d
        d += align
    return best


def linear_kernel(x_ref, w_ref, b_ref, o_ref):
    """Computes one (tm, tn) output tile, accumulated over the K grid axis.

    x_ref: (tm, tk)  activations (f32; cast to the weight dtype for the MXU)
    w_ref: (tk, tn)  pre-transposed, pre-padded weight (bf16 by default)
    b_ref: (1, tn)   f32 bias
    o_ref: (tm, tn)  f32 output block, resident across the K ("arbitrary") axis
    """
    k = pl.program_id(2)

    @pl.when(k == 0)
    def _():
        # Initialise with the bias; no separate accumulator / epilogue needed
        # because the output dtype is f32.
        o_ref[...] = jnp.broadcast_to(b_ref[...], o_ref.shape)

    x_tile = x_ref[...]
    w_tile = w_ref[...]
    if x_tile.dtype != w_tile.dtype:           # static (trace-time) branch
        x_tile = x_tile.astype(w_tile.dtype)   # native bf16 MXU path
    o_ref[...] += jnp.dot(x_tile, w_tile, preferred_element_type=jnp.float32)


def pack_linear_params(weight, bias, *, param_dtype=jnp.bfloat16):
    """One-time packing of PyTorch nn.Linear parameters (NOT in the hot path).

    weight: [N, K]  (PyTorch [out_features, in_features])
    bias:   [N]
    Returns (w_packed [Kp, Np], b_packed [1, Np]) with Kp/Np rounded up to 128.
    """
    N, K = weight.shape
    assert bias.shape == (N,), "bias shape mismatch"
    Kp = _round_up(K, 128)
    Np = _round_up(N, 128)
    w = jnp.pad(weight.astype(jnp.float32), ((0, Np - N), (0, Kp - K)))
    w_packed = w.T.astype(param_dtype)                                 # [Kp, Np]
    b_packed = jnp.pad(bias.astype(jnp.float32), (0, Np - N)).reshape(1, Np)
    return w_packed, b_packed


def linear_forward(x, w_packed, b_packed, out_features, *, tm=256, tn=512, tk=2048):
    """y = x @ W.T + b using parameters packed by `pack_linear_params`."""
    M, K = x.shape
    Kp, Np = w_packed.shape
    N = out_features
    assert Kp == _round_up(K, 128), "packed weight K mismatch"
    assert Np == _round_up(N, 128) and Np >= N, "packed weight N mismatch"
    assert b_packed.shape == (1, Np), "packed bias mismatch"

    # Only the reduction (K) dimension ever needs zero padding; garbage in
    # padded M/N regions only touches output elements that get dropped.
    if Kp != K:
        x = jnp.pad(x, ((0, 0), (0, Kp - K)))

    # ---- tile selection (safe on v5e / v6e / v7x) ----
    tm = min(tm, _round_up(M, 8))
    tk = _largest_aligned_divisor(Kp, 128, tk)
    tn = _largest_aligned_divisor(Np, 128, tn)
    gm = pl.cdiv(M, tm)
    if gm == 1 and Np // tn == 1 and Np >= 256:
        # Single M block: split N so a "parallel" axis has >= 2 blocks and both
        # v7x TensorCores get work (near-free on v5e/v6e: one extra grid step).
        tn = _largest_aligned_divisor(Np, 128, Np // 2)
    gn = Np // tn
    gk = Kp // tk

    x_bytes = x.dtype.itemsize
    w_bytes = w_packed.dtype.itemsize
    cost = pl.CostEstimate(
        flops=2 * M * Kp * Np,
        transcendentals=0,
        bytes_accessed=(M * Kp * x_bytes * gn        # x re-read once per N block
                        + Kp * Np * w_bytes * gm     # W re-read once per M block
                        + M * Np * 4                 # output write
                        + Np * 4),                   # bias
    )

    out = pl.pallas_call(
        linear_kernel,
        out_shape=jax.ShapeDtypeStruct((M, Np), jnp.float32),
        grid_spec=pltpu.PrefetchScalarGridSpec(
            num_scalar_prefetch=0,
            grid=(gm, gn, gk),
            in_specs=[
                pl.BlockSpec((tm, tk), lambda i, j, k: (i, k)),   # activations
                pl.BlockSpec((tk, tn), lambda i, j, k: (k, j)),   # weight [K, N]
                pl.BlockSpec((1, tn), lambda i, j, k: (0, j)),    # bias
            ],
            out_specs=pl.BlockSpec((tm, tn), lambda i, j, k: (i, j)),
        ),
        compiler_params=pltpu.CompilerParams(
            dimension_semantics=("parallel", "parallel", "arbitrary"),
            # ~10 MiB double-buffered working set at default tiles; 32 MiB
            # raises v5e's 16 MiB scoped default and is within v7x's budget.
            vmem_limit_bytes=32 * 1024 * 1024,
        ),
        cost_estimate=cost,
    )(x, w_packed, b_packed)

    return out[:, :N] if Np != N else out


def simple_nn_forward(x, weight, bias, *, param_dtype=jnp.bfloat16):
    """SimpleNN.forward.  (Packing would normally be done once at load time.)"""
    w_packed, b_packed = pack_linear_params(weight, bias, param_dtype=param_dtype)
    return linear_forward(x, w_packed, b_packed, weight.shape[0])


if __name__ == "__main__":
    key = jax.random.PRNGKey(0)

    def make_case(case_key, batch, in_dim, out_dim):
        k1, k2, k3 = jax.random.split(case_key, 3)
        bound = 1.0 / (in_dim ** 0.5)
        x = jax.random.normal(k1, (batch, in_dim), dtype=jnp.float32)
        w = jax.random.uniform(k2, (out_dim, in_dim), minval=-bound, maxval=bound,
                               dtype=jnp.float32)
        b = jax.random.uniform(k3, (out_dim,), minval=-bound, maxval=bound,
                               dtype=jnp.float32)
        return x, w, b

    def reference(x, w, b):
        return jnp.dot(x, w.T, precision=jax.lax.Precision.HIGHEST) + b

    # Case 1: aligned SimpleNN shapes, default bf16 weight stream / f32 accumulate.
    key, sub = jax.random.split(key)
    x, w, b = make_case(sub, batch=8, in_dim=256, out_dim=128)
    w_packed, b_packed = pack_linear_params(w, b)          # one-time pack
    y = jax.block_until_ready(linear_forward(x, w_packed, b_packed, w.shape[0]))
    assert y.shape == (8, 128)
    assert jnp.allclose(y, reference(x, w, b), atol=3e-2, rtol=3e-2)

    # Case 2: non-aligned shapes (K zero-pad, uneven M block, sliced N columns).
    key, sub = jax.random.split(key)
    x2, w2, b2 = make_case(sub, batch=5, in_dim=300, out_dim=100)
    w2_packed, b2_packed = pack_linear_params(w2, b2)
    y2 = jax.block_until_ready(linear_forward(x2, w2_packed, b2_packed, w2.shape[0]))
    assert y2.shape == (5, 100)
    assert jnp.allclose(y2, reference(x2, w2, b2), atol=3e-2, rtol=3e-2)

    # Case 3: f32 parameter path stays numerically tight vs. the f32 reference.
    y3 = jax.block_until_ready(simple_nn_forward(x2, w2, b2, param_dtype=jnp.float32))
    assert jnp.allclose(y3, reference(x2, w2, b2), atol=1e-4, rtol=1e-4)

    print("KERNEL_OK")
</pallas_src>

<mosaic_0001>
module attributes {stable_mosaic.version = 11 : i64} {
  func.func @linear_kernel(%arg0: i32, %arg1: i32, %arg2: i32, %arg3: memref<8x256xf32, #tpu.memory_space<vmem>>, %arg4: memref<256x128xbf16, #tpu.memory_space<vmem>>, %arg5: memref<1x128xf32, #tpu.memory_space<vmem>>, %arg6: memref<8x128xf32, #tpu.memory_space<vmem>>) attributes {dimension_semantics = [#tpu.dimension_semantics<parallel>, #tpu.dimension_semantics<parallel>, #tpu.dimension_semantics<arbitrary>], iteration_bounds = array<i64: 1, 1, 1>, scalar_prefetch = 0 : i64, scratch_operands = 0 : i64, tpu.core_type = #tpu.core_type<tc>, window_params = [{transform_indices = @transform_0, window_bounds = array<i64: 8, 256>}, {transform_indices = @transform_1, window_bounds = array<i64: 256, 128>}, {transform_indices = @transform_2, window_bounds = array<i64: 1, 128>}, {transform_indices = @transform_3, window_bounds = array<i64: 8, 128>}]} {
    %c0_i32 = arith.constant 0 : i32
    %0 = arith.cmpi eq, %arg2, %c0_i32 : i32
    %1 = arith.extui %0 : i1 to i32
    %c0_i32_0 = arith.constant 0 : i32
    %2 = arith.cmpi ne, %1, %c0_i32_0 : i32
    scf.if %2 {
      %c0_8 = arith.constant 0 : index
      %c0_9 = arith.constant 0 : index
      %10 = vector.load %arg5[%c0_8, %c0_9] : memref<1x128xf32, #tpu.memory_space<vmem>>, vector<1x128xf32>
      %11 = vector.shape_cast %10 : vector<1x128xf32> to vector<1x128xf32>
      %12 = vector.broadcast %11 : vector<1x128xf32> to vector<8x128xf32>
      %c0_10 = arith.constant 0 : index
      %c0_11 = arith.constant 0 : index
      %13 = vector.load %arg6[%c0_10, %c0_11] : memref<8x128xf32, #tpu.memory_space<vmem>>, vector<8x128xf32>
      tpu.vector_store %arg6[%c0_10, %c0_11], %12 {strides = array<i32>} : memref<8x128xf32, #tpu.memory_space<vmem>>, vector<8x128xf32>,
    } else {
    }
    %c0 = arith.constant 0 : index
    %c0_1 = arith.constant 0 : index
    %3 = vector.load %arg3[%c0, %c0_1] : memref<8x256xf32, #tpu.memory_space<vmem>>, vector<8x256xf32>
    %c0_2 = arith.constant 0 : index
    %c0_3 = arith.constant 0 : index
    %4 = vector.load %arg4[%c0_2, %c0_3] : memref<256x128xbf16, #tpu.memory_space<vmem>>, vector<256x128xbf16>
    %5 = arith.truncf %3 : vector<8x256xf32> to vector<8x256xbf16>
    %c0_4 = arith.constant 0 : index
    %c0_5 = arith.constant 0 : index
    %6 = vector.load %arg6[%c0_4, %c0_5] : memref<8x128xf32, #tpu.memory_space<vmem>>, vector<8x128xf32>
    %cst = arith.constant dense<0.000000e+00> : vector<8x128xf32>
    %7 = tpu.matmul %5, %4, %cst {dimension_numbers = #tpu.dot_dimension_numbers<[1], [0], [0], [1], [0, 0, 1, 1], [], []>} : vector<8x256xbf16>, vector<256x128xbf16>, vector<8x128xf32> -> vector<8x128xf32>
    %8 = arith.addf %6, %7 : vector<8x128xf32>
    %c0_6 = arith.constant 0 : index
    %c0_7 = arith.constant 0 : index
    %9 = vector.load %arg6[%c0_6, %c0_7] : memref<8x128xf32, #tpu.memory_space<vmem>>, vector<8x128xf32>
    tpu.vector_store %arg6[%c0_6, %c0_7], %8 {strides = array<i32>} : memref<8x128xf32, #tpu.memory_space<vmem>>, vector<8x128xf32>,
    return
  }
  func.func @transform_0(%arg0: i32, %arg1: i32, %arg2: i32) -> (i32, i32) {
    %c0_i32 = arith.constant 0 : i32
    return %arg0, %arg2 : i32, i32
  }
  func.func @transform_1(%arg0: i32, %arg1: i32, %arg2: i32) -> (i32, i32) {
    %c0_i32 = arith.constant 0 : i32
    return %arg2, %arg1 : i32, i32
  }
  func.func @transform_2(%arg0: i32, %arg1: i32, %arg2: i32) -> (i32, i32) {
    %c0_i32 = arith.constant 0 : i32
    %c0_i32_0 = arith.constant 0 : i32
    return %c0_i32, %arg1 : i32, i32
  }
  func.func @transform_3(%arg0: i32, %arg1: i32, %arg2: i32) -> (i32, i32) {
    %c0_i32 = arith.constant 0 : i32
    return %arg0, %arg1 : i32, i32
  }
}

</mosaic_0001>

<llo_original>
// kernel: tpu_custom_call.1
$region0: #{tpu_custom_call.1}
  #allocation0 [shape = 'u32[]', space=smem, size = 0x4, offset = 0x4, fixed_abs, tag = 'smem constant byte address 0x4 - core index']
  #allocation1 [shape = 'u32[144,128]{1,0:T(1,128)}', space=vmem, size = 0x12000, scoped, tag = 'internal scratch']
  %s0 = inlined_call_operand.hbm [shape: f32[8,256], index: 0, kind: input, shape index: {}]
  %s1 = inlined_call_operand.hbm [shape: bf16[256,128], index: 1, kind: input, shape index: {}]
  %s2 = inlined_call_operand.vmem [shape: f32[1,128], index: 2, kind: input, shape index: {}]
  %s3 = inlined_call_operand.hbm [shape: f32[8,128], index: 3, kind: output, shape index: {}]
  %s4 = sld [smem:[#allocation0]]
  $region34: #{tpu_custom_call.1} parent=0
    _
  %s6 = ssub.s32 1, %s4
  %s7 = scalar_select 0, %s6, %s4
  $region1: #{tpu_custom_call.1} parent=0
    #allocation2 [shape = 'u8[8192]{0}', space=vmem, size = 0x2000, scoped, tag = 'input window, operand 0, single buffered']
    #allocation3 [shape = 's32[1]{0}', space=sflag, size = 0x4, scoped, tag = 'scoped memory for tpu_custom_call.1']
    #allocation4 [shape = 's32[1]{0}', space=sflag, size = 0x4, scoped, tag = 'scoped memory for tpu_custom_call.1']
    #allocation5 [shape = 'u8[65536]{0}', space=vmem, size = 0x10000, scoped, tag = 'input window, operand 1, single buffered']
    #allocation6 [shape = 's32[1]{0}', space=sflag, size = 0x4, scoped, tag = 'scoped memory for tpu_custom_call.1']
    #allocation7 [shape = 'u8[4096]{0}', space=vmem, size = 0x1000, scoped, tag = 'output window, operand 0, single buffered']
    %8 = vsyncpa [#allocation3], 0
    %9 = vsyncpa [#allocation6], 0
    %10 = vsyncpa [#allocation4], 0
    // Predicated region
    $region2: #{tpu_custom_call.1} parent=1 // pred_check
      _
    $region3: #{tpu_custom_call.1} parent=1 // pred_check_branch
      %12 = sbr.rel (0) target = $region5
    $region4: #{tpu_custom_call.1} parent=1 // pred_region
      %s14 = ssub.s32 256, 256
      %15 = vsyncadd [#allocation3], %s14
      %s17 = sshll.u32 [#allocation2], 4
      %s18 = int_to_ptr.vmem [resolvable:$true] %s17
      %20 = dma.hbm_to_vmem [thread:$0]  %s0, 256, %s18, [#allocation3]
    $region5: #{tpu_custom_call.1} parent=1 // pred_fallthru
      _
    // Predicated region
    $region6: #{tpu_custom_call.1} parent=1 // pred_check
      _
    $region7: #{tpu_custom_call.1} parent=1 // pred_check_branch
      %22 = sbr.rel (0) target = $region9
    $region8: #{tpu_custom_call.1} parent=1 // pred_region
      %s24 = ssub.s32 2048, 2048
      %25 = vsyncadd [#allocation6], %s24
      %s26 = sshll.u32 [#allocation5], 4
      %s27 = int_to_ptr.vmem [resolvable:$true] %s26
      %32 = dma.hbm_to_vmem [thread:$0]  %s1, 2048, %s27, [#allocation6], 64, 64, 4
    $region9: #{tpu_custom_call.1} parent=1 // pred_fallthru
      _
    // Predicated region
    $region10: #{tpu_custom_call.1} parent=1 // pred_check
      _
    $region11: #{tpu_custom_call.1} parent=1 // pred_check_branch
      %34 = sbr.rel (0) target = $region13
    $region12: #{tpu_custom_call.1} parent=1 // pred_region
      _
    $region13: #{tpu_custom_call.1} parent=1 // pred_fallthru
      _
    // Predicated region
    $region14: #{tpu_custom_call.1} parent=1 // pred_check
      _
    $region15: #{tpu_custom_call.1} parent=1 // pred_check_branch
      %36 = sbr.rel (0) target = $region17
    $region16: #{tpu_custom_call.1} parent=1 // pred_region
      %37 = dma.done [#allocation3], 256
    $region17: #{tpu_custom_call.1} parent=1 // pred_fallthru
      _
    // Predicated region
    $region18: #{tpu_custom_call.1} parent=1 // pred_check
      _
    $region19: #{tpu_custom_call.1} parent=1 // pred_check_branch
      %39 = sbr.rel (0) target = $region21
    $region20: #{tpu_custom_call.1} parent=1 // pred_region
      %40 = dma.done [#allocation6], 2048
    $region21: #{tpu_custom_call.1} parent=1 // pred_fallthru
      _
    %p42 = scmp.eq.s32.totalorder 0, 0
    // Predicated region
    $region22: #{tpu_custom_call.1} parent=1 // pred_check
      %p43 = pneg %p42
    $region23: #{tpu_custom_call.1} parent=1 // pred_check_branch
      %45 = sbr.rel (%p43) target = $region25
    $region24: #{tpu_custom_call.1} parent=1 // pred_region
      %v46 = vld [vmem:[%s2] sm:$0x1]
      %v48 = vlaneseq
      %v49 = vshrl.u32 %v48, 7
      %v50 = vsub.s32 0, %v49
      %v51 = vrot.slane %v46, %v50
      %53 = vst [vmem:[#allocation7] sm:$0xff] %v51
    $region25: #{tpu_custom_call.1} parent=1 // pred_fallthru
      _
    %v54 = vld [vmem:[#allocation2] sm:$0xff]
    %v55 = vld [vmem:[#allocation2 + $0x8] sm:$0xff]
    %v56 = vld [vmem:[#allocation5] sm:$0xf]
    %v57 = vld [vmem:[#allocation5 + $0x4] sm:$0xf]
    %v58 = vld [vmem:[#allocation5 + $0x8] sm:$0xf]
    %v59 = vld [vmem:[#allocation5 + $0xc] sm:$0xf]
    %v60 = vld [vmem:[#allocation5 + $0x10] sm:$0xf]
    %v61 = vld [vmem:[#allocation5 + $0x14] sm:$0xf]
    %v62 = vld [vmem:[#allocation5 + $0x18] sm:$0xf]
    %v63 = vld [vmem:[#allocation5 + $0x1c] sm:$0xf]
    %v64 = vld [vmem:[#allocation5 + $0x20] sm:$0xf]
    %v65 = vld [vmem:[#allocation5 + $0x24] sm:$0xf]
    %v66 = vld [vmem:[#allocation5 + $0x28] sm:$0xf]
    %v67 = vld [vmem:[#allocation5 + $0x2c] sm:$0xf]
    %v68 = vld [vmem:[#allocation5 + $0x30] sm:$0xf]
    %v69 = vld [vmem:[#allocation5 + $0x34] sm:$0xf]
    %v70 = vld [vmem:[#allocation5 + $0x38] sm:$0xf]
    %v71 = vld [vmem:[#allocation5 + $0x3c] sm:$0xf]
    %v72 = vld [vmem:[#allocation5 + $0x40] sm:$0xf]
    %v73 = vld [vmem:[#allocation5 + $0x44] sm:$0xf]
    %v74 = vld [vmem:[#allocation5 + $0x48] sm:$0xf]
    %v75 = vld [vmem:[#allocation5 + $0x4c] sm:$0xf]
    %v76 = vld [vmem:[#allocation5 + $0x50] sm:$0xf]
    %v77 = vld [vmem:[#allocation5 + $0x54] sm:$0xf]
    %v78 = vld [vmem:[#allocation5 + $0x58] sm:$0xf]
    %v79 = vld [vmem:[#allocation5 + $0x5c] sm:$0xf]
    %v80 = vld [vmem:[#allocation5 + $0x60] sm:$0xf]
    %v81 = vld [vmem:[#allocation5 + $0x64] sm:$0xf]
    %v82 = vld [vmem:[#allocation5 + $0x68] sm:$0xf]
    %v83 = vld [vmem:[#allocation5 + $0x6c] sm:$0xf]
    %v84 = vld [vmem:[#allocation5 + $0x70] sm:$0xf]
    %v85 = vld [vmem:[#allocation5 + $0x74] sm:$0xf]
    %v86 = vld [vmem:[#allocation5 + $0x78] sm:$0xf]
    %v87 = vld [vmem:[#allocation5 + $0x7c] sm:$0xf]
    %v88 = vpack.c.bf16 %v54, %v54
    %v89 = vpack.c.bf16 %v55, %v55
    %v90 = vld [vmem:[#allocation7] sm:$0xff]
    %v123 = vunpack.c.l.b16 %v56
    %v124 = vunpack.c.l.b16 %v57
    %v125 = vunpack.c.l.b16 %v58
    %v126 = vunpack.c.l.b16 %v59
    %v127 = vunpack.c.l.b16 %v60
    %v128 = vunpack.c.l.b16 %v61
    %v129 = vunpack.c.l.b16 %v62
    %v130 = vunpack.c.l.b16 %v63
    %v131 = vunpack.c.l.b16 %v64
    %v132 = vunpack.c.l.b16 %v65
    %v133 = vunpack.c.l.b16 %v66
    %v134 = vunpack.c.l.b16 %v67
    %v135 = vunpack.c.l.b16 %v68
    %v136 = vunpack.c.l.b16 %v69
    %v137 = vunpack.c.l.b16 %v70
    %v138 = vunpack.c.l.b16 %v71
    %v139 = vunpack.c.l.b16 %v72
    %v140 = vunpack.c.l.b16 %v73
    %v141 = vunpack.c.l.b16 %v74
    %v142 = vunpack.c.l.b16 %v75
    %v143 = vunpack.c.l.b16 %v76
    %v144 = vunpack.c.l.b16 %v77
    %v145 = vunpack.c.l.b16 %v78
    %v146 = vunpack.c.l.b16 %v79
    %v147 = vunpack.c.l.b16 %v80
    %v148 = vunpack.c.l.b16 %v81
    %v149 = vunpack.c.l.b16 %v82
    %v150 = vunpack.c.l.b16 %v83
    %v151 = vunpack.c.l.b16 %v84
    %v152 = vunpack.c.l.b16 %v85
    %v153 = vunpack.c.l.b16 %v86
    %v154 = vunpack.c.l.b16 %v87
    %v155 = vpack.c.b16 %v124, %v123
    %v156 = vpack.c.b16 %v126, %v125
    %v157 = vpack.c.b16 %v128, %v127
    %v158 = vpack.c.b16 %v130, %v129
    %v159 = vpack.c.b16 %v132, %v131
    %v160 = vpack.c.b16 %v134, %v133
    %v161 = vpack.c.b16 %v136, %v135
    %v162 = vpack.c.b16 %v138, %v137
    %v163 = vpack.c.b16 %v140, %v139
    %v164 = vpack.c.b16 %v142, %v141
    %v165 = vpack.c.b16 %v144, %v143
    %v166 = vpack.c.b16 %v146, %v145
    %v167 = vpack.c.b16 %v148, %v147
    %v168 = vpack.c.b16 %v150, %v149
    %v169 = vpack.c.b16 %v152, %v151
    %v170 = vpack.c.b16 %v154, %v153
    %187 = vmatprep.subr.bf16.mxu0 0
    %188 = vmatpush1.bf16.msra.mxu0 %v155
    %189 = vmatprep.subr.bf16.mxu0 0
    %190 = vmatpush1.bf16.msra.mxu0 %v156
    %191 = vmatprep.subr.bf16.mxu0 0
    %192 = vmatpush1.bf16.msra.mxu0 %v157
    %193 = vmatprep.subr.bf16.mxu0 0
    %194 = vmatpush1.bf16.msra.mxu0 %v158
    %195 = vmatprep.subr.bf16.mxu0 0
    %196 = vmatpush1.bf16.msra.mxu0 %v159
    %197 = vmatprep.subr.bf16.mxu0 0
    %198 = vmatpush1.bf16.msra.mxu0 %v160
    %199 = vmatprep.subr.bf16.mxu0 0
    %200 = vmatpush1.bf16.msra.mxu0 %v161
    %201 = vmatprep.subr.bf16.mxu0 0
    %202 = vmatpush1.bf16.msra.mxu0 %v162
    %203 = vmatprep.subr.bf16.mxu0 0
    %204 = vmatpush1.bf16.msra.mxu0 %v163
    %205 = vmatprep.subr.bf16.mxu0 0
    %206 = vmatpush1.bf16.msra.mxu0 %v164
    %207 = vmatprep.subr.bf16.mxu0 0
    %208 = vmatpush1.bf16.msra.mxu0 %v165
    %209 = vmatprep.subr.bf16.mxu0 0
    %210 = vmatpush1.bf16.msra.mxu0 %v166
    %211 = vmatprep.subr.bf16.mxu0 0
    %212 = vmatpush1.bf16.msra.mxu0 %v167
    %213 = vmatprep.subr.bf16.mxu0 0
    %214 = vmatpush1.bf16.msra.mxu0 %v168
    %215 = vmatprep.subr.bf16.mxu0 0
    %216 = vmatpush1.bf16.msra.mxu0 %v169
    %217 = vmatprep.subr.bf16.mxu0 0
    %218 = vmatpush1.bf16.msra.mxu0 %v170
    %219 = vmatprep.mubr.bf16.mxu0 %v89
    %220 = vmatmul.mubr.bf16.gmra.mrb[0].mxu0 %v88
    %v221 = vpop.f32.mrb[0].mxu0
    %v222 = vadd.f32 0.0, %v221
    %v223 = vpop.f32.mrb[0].mxu0
    %v224 = vpop.f32.mrb[0].mxu0
    %v225 = vpop.f32.mrb[0].mxu0
    %226 = vdwg.mxu0
    %v227 = vadd.f32 %v90, %v222
    %228 = vst [vmem:[#allocation7] sm:$0xff] %v227
    // Predicated region
    $region26: #{tpu_custom_call.1} parent=1 // pred_check
      _
    $region27: #{tpu_custom_call.1} parent=1 // pred_check_branch
      %230 = sbr.rel (0) target = $region29
    $region28: #{tpu_custom_call.1} parent=1 // pred_region
      %s232 = ssub.s32 128, 128
      %233 = vsyncadd [#allocation4], %s232
      %s235 = sshll.u32 [#allocation7], 4
      %s236 = int_to_ptr.vmem [resolvable:$true] %s235
      %238 = dma.vmem_to_hbm [thread:$0]  %s236, 128, %s3, [#allocation4]
    $region29: #{tpu_custom_call.1} parent=1 // pred_fallthru
      _
    // Predicated region
    $region30: #{tpu_custom_call.1} parent=1 // pred_check
      _
    $region31: #{tpu_custom_call.1} parent=1 // pred_check_branch
      %240 = sbr.rel (0) target = $region33
    $region32: #{tpu_custom_call.1} parent=1 // pred_region
      %241 = dma.done [#allocation4], 128
    $region33: #{tpu_custom_call.1} parent=1 // pred_fallthru
      _
    %242 = vsyncpa [#allocation3], 1
    %243 = vsyncpa [#allocation6], 1
    %244 = vsyncpa [#allocation4], 1

</llo_original>
